<compile_context>
chip_gen: v7x
topology: tpu7x:2x2x1
jax: 0.10.0
libtpu: 0.0.40
codegen_flags: <defaults>
</compile_context>

<pallas_src>
import math
import functools

import jax
import jax.numpy as jnp
from jax.experimental import pallas as pl
from jax.experimental.pallas import tpu as pltpu

_LANES = 128
# 3 arrays (x, pe, out) x 2 pipeline buffers x TR x 128 lanes x 4 B <= ~12 MiB
# -> TR <= 4096 for f32.  Safe on v5e/v6e (128 MiB VMEM) and v7x (64 MiB VMEM).
_MAX_ROW_TILE = 4096


def _build_pe(seq_length: int, d_model: int, dtype=jnp.float32) -> jnp.ndarray:
    """Sinusoidal positional-encoding buffer, shape (S, D), matching torch init."""
    position = jnp.arange(seq_length, dtype=jnp.float32)[:, None]            # (S, 1)
    div_term = jnp.exp(jnp.arange(0, d_model, 2, dtype=jnp.float32)
                       * (-math.log(10000.0) / d_model))                     # (D/2,)
    angles = position * div_term                                             # (S, D/2)
    pe = jnp.zeros((seq_length, d_model), dtype=jnp.float32)
    pe = pe.at[:, 0::2].set(jnp.sin(angles))
    pe = pe.at[:, 1::2].set(jnp.cos(angles))
    return pe.astype(dtype)                                                  # (S, D)


def _make_kernel(dropout_p: float):
    """Kernel body: out = dropout(x + pe). Dropout path only traced if p > 0."""
    inv_keep = 1.0 / (1.0 - dropout_p) if dropout_p < 1.0 else 0.0

    def kernel(seed_ref, x_ref, pe_ref, o_ref):
        # x_ref/o_ref: (TR, 128) (batch dim squeezed); pe_ref: (TR, 128), same dtype.
        y = x_ref[...] + pe_ref[...]
        if dropout_p > 0.0:
            # Inverted dropout, re-seeded per grid step -> no carried PRNG state,
            # so both grid axes can be "parallel".  Stochastic, like nn.Dropout
            # in train mode (cannot be bit-exact to torch RNG).
            step = pl.program_id(0) * pl.num_programs(1) + pl.program_id(1)
            pltpu.prng_seed(seed_ref[0] + step)
            bits = pltpu.bitcast(pltpu.prng_random_bits(y.shape), jnp.uint32)
            # drop prob = floor(p * 2^32) / 2^32 (negligibly below p).
            thresh = jnp.uint32(min(int(dropout_p * (2.0 ** 32)), 2 ** 32 - 1))
            keep = bits >= thresh
            y = jnp.where(keep, y * inv_keep, jnp.zeros_like(y))
        o_ref[...] = y.astype(o_ref.dtype)

    return kernel


def _choose_row_tile(rows: int) -> int:
    if rows <= _MAX_ROW_TILE:
        return rows            # full extent along that axis -> always a legal block
    return _MAX_ROW_TILE       # multiple of 8; partial last block is masked by Pallas


@functools.partial(jax.jit, static_argnames=("dropout_p",))
def positional_encoding_forward(x, pe, seed, *, dropout_p: float = 0.0):
    """x: (B, S, D); pe: (S, D); seed: (1,) int32.  Returns dropout(x + pe)."""
    B, S, D = x.shape
    out_dtype = x.dtype
    pe = pe.astype(out_dtype)                      # narrow pe loads for bf16 models

    # --- lane-dense re-layout: flatten (S, D), pad to a multiple of 128 lanes ---
    sd = S * D
    sd_pad = ((sd + _LANES - 1) // _LANES) * _LANES
    x_flat = x.reshape(B, sd)
    pe_flat = pe.reshape(sd)
    if sd_pad != sd:
        x_flat = jnp.pad(x_flat, ((0, 0), (0, sd_pad - sd)))
        pe_flat = jnp.pad(pe_flat, (0, sd_pad - sd))
    rows = sd_pad // _LANES
    x2 = x_flat.reshape(B, rows, _LANES)           # (B, rows, 128)
    pe2 = pe_flat.reshape(rows, _LANES)            # (rows, 128), shared across batch

    tr = _choose_row_tile(rows)
    row_tiles = pl.cdiv(rows, tr)

    kernel = _make_kernel(float(dropout_p))
    out = pl.pallas_call(
        kernel,
        out_shape=jax.ShapeDtypeStruct((B, rows, _LANES), out_dtype),
        grid_spec=pltpu.PrefetchScalarGridSpec(
            num_scalar_prefetch=1,                 # seed -> SMEM
            # Batch innermost: pe's block index only depends on the outer axis,
            # so the pe tile stays VMEM-resident across all B inner iterations.
            grid=(row_tiles, B),
            in_specs=[
                pl.BlockSpec((pl.Squeezed(), tr, _LANES),
                             lambda s, b, seed: (b, s, 0)),       # x block
                pl.BlockSpec((tr, _LANES),
                             lambda s, b, seed: (s, 0)),          # pe (batch-shared)
            ],
            out_specs=pl.BlockSpec((pl.Squeezed(), tr, _LANES),
                                   lambda s, b, seed: (b, s, 0)),
        ),
        compiler_params=pltpu.CompilerParams(
            # No carried state between grid steps (per-step PRNG seed), so both
            # axes are parallel -> shards across v7x's two TensorCores.
            dimension_semantics=("parallel", "parallel"),
            # Headroom for the larger tiles; well under 64 MiB (v7x) / 128 MiB.
            vmem_limit_bytes=32 * 1024 * 1024,
        ),
    )(seed, x2, pe2)

    out = out.reshape(B, sd_pad)
    if sd_pad != sd:
        out = out[:, :sd]
    return out.reshape(B, S, D)

# TODO(synk): if this op sits between other elementwise ops in the full model,
# fuse the add+dropout into the neighboring kernel to avoid the extra HBM pass.


if __name__ == "__main__":
    # Small shapes implied by the module: batch=2, seq_length=8, d_model=32.
    B, S, D = 2, 8, 32
    dropout_p = 0.0  # deterministic check; set >0.0 to exercise dropout path

    key = jax.random.PRNGKey(0)
    x = jax.random.normal(key, (B, S, D), dtype=jnp.float32)
    pe = _build_pe(S, D, dtype=x.dtype)
    seed = jnp.array([0], dtype=jnp.int32)

    out = positional_encoding_forward(x, pe, seed, dropout_p=dropout_p)
    out = jax.block_until_ready(out)

    # Pure-JAX reference (dropout_p == 0.0 -> identity dropout, matches eval).
    ref = x + pe[None, :, :]
    assert out.shape == (B, S, D) and out.dtype == x.dtype
    assert jnp.allclose(out, ref, atol=1e-6, rtol=1e-6)

    print("KERNEL_OK")
</pallas_src>

<mosaic_0001>
module attributes {stable_mosaic.version = 11 : i64} {
  func.func @kernel(%arg0: i32, %arg1: i32, %arg2: memref<1xi32, #tpu.memory_space<smem>>, %arg3: memref<1x2x128xf32, #tpu.memory_space<vmem>>, %arg4: memref<2x128xf32, #tpu.memory_space<vmem>>, %arg5: memref<1x2x128xf32, #tpu.memory_space<vmem>>) attributes {dimension_semantics = [#tpu.dimension_semantics<parallel>, #tpu.dimension_semantics<parallel>], iteration_bounds = array<i64: 1, 2>, scalar_prefetch = 1 : i64, scratch_operands = 0 : i64, tpu.core_type = #tpu.core_type<tc>, window_params = [{transform_indices = @transform_0, window_bounds = array<i64: 1, 2, 128>}, {transform_indices = @transform_1, window_bounds = array<i64: 2, 128>}, {transform_indices = @transform_2, window_bounds = array<i64: 1, 2, 128>}]} {
    %c0 = arith.constant 0 : index
    %c0_0 = arith.constant 0 : index
    %c0_1 = arith.constant 0 : index
    %0 = vector.load %arg3[%c0, %c0_0, %c0_1] : memref<1x2x128xf32, #tpu.memory_space<vmem>>, vector<1x2x128xf32>
    %1 = vector.shape_cast %0 : vector<1x2x128xf32> to vector<2x128xf32>
    %c0_2 = arith.constant 0 : index
    %c0_3 = arith.constant 0 : index
    %2 = vector.load %arg4[%c0_2, %c0_3] : memref<2x128xf32, #tpu.memory_space<vmem>>, vector<2x128xf32>
    %3 = arith.addf %1, %2 : vector<2x128xf32>
    %c0_4 = arith.constant 0 : index
    %c0_5 = arith.constant 0 : index
    %c0_6 = arith.constant 0 : index
    %4 = vector.load %arg5[%c0_4, %c0_5, %c0_6] : memref<1x2x128xf32, #tpu.memory_space<vmem>>, vector<1x2x128xf32>
    %5 = vector.shape_cast %4 : vector<1x2x128xf32> to vector<2x128xf32>
    %6 = vector.shape_cast %3 : vector<2x128xf32> to vector<1x2x128xf32>
    tpu.vector_store %arg5[%c0_4, %c0_5, %c0_6], %6 {strides = array<i32>} : memref<1x2x128xf32, #tpu.memory_space<vmem>>, vector<1x2x128xf32>,
    return
  }
  func.func @transform_0(%arg0: i32, %arg1: i32, %arg2: memref<1xi32, #tpu.memory_space<smem>>) -> (i32, i32, i32) {
    %c0_i32 = arith.constant 0 : i32
    %c0_i32_0 = arith.constant 0 : i32
    return %arg1, %arg0, %c0_i32 : i32, i32, i32
  }
  func.func @transform_1(%arg0: i32, %arg1: i32, %arg2: memref<1xi32, #tpu.memory_space<smem>>) -> (i32, i32) {
    %c0_i32 = arith.constant 0 : i32
    %c0_i32_0 = arith.constant 0 : i32
    return %arg0, %c0_i32 : i32, i32
  }
  func.func @transform_2(%arg0: i32, %arg1: i32, %arg2: memref<1xi32, #tpu.memory_space<smem>>) -> (i32, i32, i32) {
    %c0_i32 = arith.constant 0 : i32
    %c0_i32_0 = arith.constant 0 : i32
    return %arg1, %arg0, %c0_i32 : i32, i32, i32
  }
}

</mosaic_0001>

<llo_original>
// kernel: positional_encoding_forward.1
$region0: #{positional_encoding_forward.1}
  #allocation0 [shape = 'u32[]', space=smem, size = 0x4, offset = 0x4, fixed_abs, tag = 'smem constant byte address 0x4 - core index']
  #allocation1 [shape = 'u32[144,128]{1,0:T(1,128)}', space=vmem, size = 0x12000, scoped, tag = 'internal scratch']
  #allocation2 [shape = 's32[1]{0}', space=sflag, size = 0x4, scoped, tag = 'scoped memory for positional_encoding_forward.1']
  #allocation3 [shape = 's32[1]{0:T(128)S(6)}', space=smem, size = 0x200, scoped, tag = 'prefetched SMEM operand 0']
  %s0 = inlined_call_operand.<no memory space> [shape: s32[1], index: 0, kind: input, shape index: {}]
  %s1 = inlined_call_operand.vmem [shape: f32[2,2,128], index: 1, kind: input, shape index: {}]
  %s2 = inlined_call_operand.vmem [shape: f32[2,128], index: 2, kind: input, shape index: {}]
  %s3 = inlined_call_operand.vmem [shape: f32[2,2,128], index: 3, kind: output, shape index: {}]
  %s4 = sld [smem:[#allocation0]]
  $region41: #{positional_encoding_forward.1} parent=0
    _
  %s6 = ssub.s32 1, %s4
  %s7 = scalar_select 0, %s6, %s4
  %8 = sst [smem:[#allocation3]] %s0
  loop: start=0, step=1, limit=4
  $region2: #{positional_encoding_forward.1} parent=0 // loop_pre_header
    _
  $region3: #{positional_encoding_forward.1} parent=0 // loop_header
    %s10 = sphi 0, %s14
    %p11 = scmp.ge.s32.totalorder %s10, 4
    %s17 = sphi 0, %s29
    %s18 = sphi 0, %s25
    %s19 = sphi 0, %s17
    %s20 = sphi 0, %s18
    %s21 = sphi 0, %s19
    %s22 = sphi 0, %s20
    %s34 = sphi 0, %s36
    %s37 = sphi 0, %s34
    %s38 = sphi 0, %s37
    %s54 = sphi 0, %s38
    %s60 = sphi 0, %s62
    %s63 = sphi 0, %s60
    %s64 = sphi 0, %s63
    %s80 = sphi 0, %s64
    %s88 = sphi 0, %s90
    %s91 = sphi 0, %s88
    %s92 = sphi 0, %s91
    %s108 = sphi 0, %s92
  $region4: #{positional_encoding_forward.1} parent=0 // loop_header_branch
    %13 = sbr.rel (%p11) target = $region8
  $region5: #{positional_encoding_forward.1} parent=0 // loop_body
    %s15 = ssub.s32 %s10, 1
    %s16 = ssub.s32 %s10, 2
    %s23 = sadd.s32 1, %s18
    %p24 = scmp.ge.s32.totalorder %s23, 2
    %s25 = scalar_select %p24, 0, %s23
    %s26 = sadd.s32 1, %s17
    %s27 = scalar_select %p24, %s26, %s17
    %p28 = scmp.ge.s32.totalorder %s27, 1
    %s29 = scalar_select %p28, 0, %s27
    %s30 = ssub.s32 %s18, %s25
    %s31 = ssub.s32 %s17, %s29
    %s32 = sor.u32 %s30, %s31
    %p33 = scmp.eq.s32.totalorder %s32, 0
    %s35 = sadd.s32 %s34, 1
    %s36 = scalar_select %p33, %s34, %s35
    %p39 = pneg %p33
    %p40 = scmp.eq.s32.totalorder %s10, 1
    %p41 = por %p39, %p40
    %p42 = scmp.ne.s32.totalorder %s34, %s37
    %p43 = scmp.eq.s32.totalorder %s10, 0
    %p44 = por %p42, %p43
    %p45 = scmp.ne.s32.totalorder %s34, %s37
    %p46 = scmp.eq.s32.totalorder %s15, 1
    %p47 = por %p45, %p46
    %p48 = scmp.ne.s32.totalorder %s37, %s38
    %p49 = scmp.eq.s32.totalorder %s15, 0
    %p50 = por %p48, %p49
    %p51 = scmp.ne.s32.totalorder %s37, %s38
    %p52 = scmp.eq.s32.totalorder %s16, 1
    %p53 = por %p51, %p52
    %p55 = scmp.ne.s32.totalorder %s38, %s54
    %p56 = scmp.eq.s32.totalorder %s16, 0
    %p57 = por %p55, %p56
    %s58 = ssub.s32 %s17, %s29
    %p59 = scmp.eq.s32.totalorder %s58, 0
    %s61 = sadd.s32 %s60, 1
    %s62 = scalar_select %p59, %s60, %s61
    %p65 = pneg %p59
    %p66 = scmp.eq.s32.totalorder %s10, 1
    %p67 = por %p65, %p66
    %p68 = scmp.ne.s32.totalorder %s60, %s63
    %p69 = scmp.eq.s32.totalorder %s10, 0
    %p70 = por %p68, %p69
    %p71 = scmp.ne.s32.totalorder %s60, %s63
    %p72 = scmp.eq.s32.totalorder %s15, 1
    %p73 = por %p71, %p72
    %p74 = scmp.ne.s32.totalorder %s63, %s64
    %p75 = scmp.eq.s32.totalorder %s15, 0
    %p76 = por %p74, %p75
    %p77 = scmp.ne.s32.totalorder %s63, %s64
    %p78 = scmp.eq.s32.totalorder %s16, 1
    %p79 = por %p77, %p78
    %p81 = scmp.ne.s32.totalorder %s64, %s80
    %p82 = scmp.eq.s32.totalorder %s16, 0
    %p83 = por %p81, %p82
    %s84 = ssub.s32 %s18, %s25
    %s85 = ssub.s32 %s17, %s29
    %s86 = sor.u32 %s84, %s85
    %p87 = scmp.eq.s32.totalorder %s86, 0
    %s89 = sadd.s32 %s88, 1
    %s90 = scalar_select %p87, %s88, %s89
    %p93 = pneg %p87
    %p94 = scmp.eq.s32.totalorder %s10, 1
    %p95 = por %p93, %p94
    %p96 = scmp.ne.s32.totalorder %s88, %s91
    %p97 = scmp.eq.s32.totalorder %s10, 0
    %p98 = por %p96, %p97
    %p99 = scmp.ne.s32.totalorder %s88, %s91
    %p100 = scmp.eq.s32.totalorder %s15, 1
    %p101 = por %p99, %p100
    %p102 = scmp.ne.s32.totalorder %s91, %s92
    %p103 = scmp.eq.s32.totalorder %s15, 0
    %p104 = por %p102, %p103
    %p105 = scmp.ne.s32.totalorder %s91, %s92
    %p106 = scmp.eq.s32.totalorder %s16, 1
    %p107 = por %p105, %p106
    %p109 = scmp.ne.s32.totalorder %s92, %s108
    %p110 = scmp.eq.s32.totalorder %s16, 0
    %p111 = por %p109, %p110
    %p112 = scmp.le.s32.totalorder 1, %s10
    %p113 = scmp.lt.s32.totalorder %s10, 3
    %p114 = pnand %p112, %p113
    %p115 = pneg %p114
    // Predicated region
    $region9: #{positional_encoding_forward.1} parent=5 // pred_check
      _
    $region10: #{positional_encoding_forward.1} parent=5 // pred_check_branch
      %117 = sbr.rel (%p114) target = $region12
    $region11: #{positional_encoding_forward.1} parent=5 // pred_region
      %s118 = ssub.s32 %s10, 1
      // Predicated region
      $region13: #{positional_encoding_forward.1} parent=11 // pred_check
        %p119 = pneg %p76
      $region14: #{positional_encoding_forward.1} parent=11 // pred_check_branch
        %121 = sbr.rel (%p119) target = $region16
      $region15: #{positional_encoding_forward.1} parent=11 // pred_region
        %p122 = scmp.lt.s32.totalorder %s19, 0
        %s123 = scalar_select %p122, %s19, 0
        %s124 = smul.addr %s123, 2
        %s125 = scalar_lea.vmem %s2, %s124
      $region16: #{positional_encoding_forward.1} parent=11 // pred_fallthru
        _
    $region12: #{positional_encoding_forward.1} parent=5 // pred_fallthru
      _
    %p126 = scmp.lt.s32.totalorder %s10, 2
    // Predicated region
    $region17: #{positional_encoding_forward.1} parent=5 // pred_check
      %p127 = pneg %p126
    $region18: #{positional_encoding_forward.1} parent=5 // pred_check_branch
      %129 = sbr.rel (%p127) target = $region20
    $region19: #{positional_encoding_forward.1} parent=5 // pred_region
      // Predicated region
      $region21: #{positional_encoding_forward.1} parent=19 // pred_check
        %p130 = pneg %p44
      $region22: #{positional_encoding_forward.1} parent=19 // pred_check_branch
        %132 = sbr.rel (%p130) target = $region24
      $region23: #{positional_encoding_forward.1} parent=19 // pred_region
        %p133 = scmp.lt.s32.totalorder %s18, 1
        %s134 = scalar_select %p133, %s18, 1
        %p135 = scmp.lt.s32.totalorder %s17, 0
        %s136 = scalar_select %p135, %s17, 0
        %s137 = sadd.s32 %s136, %s134
        %s138 = smul.addr %s137, 2
        %s139 = scalar_lea.vmem %s1, %s138
      $region24: #{positional_encoding_forward.1} parent=19 // pred_fallthru
        _
    $region20: #{positional_encoding_forward.1} parent=5 // pred_fallthru
      _
    %p140 = scmp.le.s32.totalorder 1, %s10
    %p141 = scmp.lt.s32.totalorder %s10, 3
    %p142 = pnand %p140, %p141
    %p143 = pneg %p142
    // Predicated region
    $region25: #{positional_encoding_forward.1} parent=5 // pred_check
      _
    $region26: #{positional_encoding_forward.1} parent=5 // pred_check_branch
      %145 = sbr.rel (%p142) target = $region28
    $region27: #{positional_encoding_forward.1} parent=5 // pred_region
      %s146 = ssub.s32 %s10, 1
      %p147 = scmp.lt.s32.totalorder %s20, 1
      %s148 = scalar_select %p147, %s20, 1
      %p149 = scmp.lt.s32.totalorder %s19, 0
      %s150 = scalar_select %p149, %s19, 0
      %s151 = sadd.s32 %s150, %s148
      %s152 = smul.addr %s151, 2
      %s153 = scalar_lea.vmem %s1, %s152
      %p154 = pneg %p50
      %p155 = pneg %p47
      %p156 = scmp.lt.s32.totalorder %s19, 0
      %s157 = scalar_select %p156, %s19, 0
      %s158 = smul.addr %s157, 2
      %s159 = scalar_lea.vmem %s2, %s158
      %p160 = pneg %p76
      %p161 = pneg %p73
      %p162 = pneg %p104
      %p163 = pneg %p101
      %p164 = scmp.lt.s32.totalorder %s20, 1
      %s165 = scalar_select %p164, %s20, 1
      %p166 = scmp.lt.s32.totalorder %s19, 0
      %s167 = scalar_select %p166, %s19, 0
      %s168 = sadd.s32 %s167, %s165
      %s169 = smul.addr %s168, 2
      %s170 = scalar_lea.vmem %s3, %s169
      %p171 = scmp.lt.s32.totalorder %s20, 1
      %s172 = scalar_select %p171, %s20, 1
      %p173 = scmp.lt.s32.totalorder %s19, 0
      %s174 = scalar_select %p173, %s19, 0
      %s175 = sadd.s32 %s174, %s172
      %s176 = smul.addr %s175, 2
      %s177 = scalar_lea.vmem %s1, %s176
      %p178 = scmp.lt.s32.totalorder %s19, 0
      %s179 = scalar_select %p178, %s19, 0
      %s180 = smul.addr %s179, 2
      %s181 = scalar_lea.vmem %s2, %s180
      %p182 = scmp.lt.s32.totalorder %s20, 1
      %s183 = scalar_select %p182, %s20, 1
      %p184 = scmp.lt.s32.totalorder %s19, 0
      %s185 = scalar_select %p184, %s19, 0
      %s186 = sadd.s32 %s185, %s183
      %s187 = smul.addr %s186, 2
      %s188 = scalar_lea.vmem %s3, %s187
      %v189 = vld [vmem:[%s177] sm:$0x3]
      %v190 = vld [vmem:[%s181] sm:$0x3]
      %v191 = vadd.f32 %v189, %v190
      %192 = vst [vmem:[%s188] sm:$0x3] %v191
      %p193 = scmp.lt.s32.totalorder %s20, 1
      %s194 = scalar_select %p193, %s20, 1
      %p195 = scmp.lt.s32.totalorder %s19, 0
      %s196 = scalar_select %p195, %s19, 0
      %s197 = sadd.s32 %s196, %s194
      %s198 = smul.addr %s197, 2
      %s199 = scalar_lea.vmem %s3, %s198
      // Predicated region
      $region29: #{positional_encoding_forward.1} parent=27 // pred_check
        %p200 = pneg %p101
      $region30: #{positional_encoding_forward.1} parent=27 // pred_check_branch
        %202 = sbr.rel (%p200) target = $region32
      $region31: #{positional_encoding_forward.1} parent=27 // pred_region
        _
      $region32: #{positional_encoding_forward.1} parent=27 // pred_fallthru
        _
    $region28: #{positional_encoding_forward.1} parent=5 // pred_fallthru
      _
    %p203 = scmp.le.s32.totalorder 2, %s10
    // Predicated region
    $region33: #{positional_encoding_forward.1} parent=5 // pred_check
      %p204 = pneg %p203
    $region34: #{positional_encoding_forward.1} parent=5 // pred_check_branch
      %206 = sbr.rel (%p204) target = $region36
    $region35: #{positional_encoding_forward.1} parent=5 // pred_region
      %s207 = ssub.s32 %s10, 2
      // Predicated region
      $region37: #{positional_encoding_forward.1} parent=35 // pred_check
        %p208 = pneg %p107
      $region38: #{positional_encoding_forward.1} parent=35 // pred_check_branch
        %210 = sbr.rel (%p208) target = $region40
      $region39: #{positional_encoding_forward.1} parent=35 // pred_region
        %p211 = scmp.lt.s32.totalorder %s22, 1
        %s212 = scalar_select %p211, %s22, 1
        %p213 = scmp.lt.s32.totalorder %s21, 0
        %s214 = scalar_select %p213, %s21, 0
        %s215 = sadd.s32 %s214, %s212
        %s216 = smul.addr %s215, 2
        %s217 = scalar_lea.vmem %s3, %s216
      $region40: #{positional_encoding_forward.1} parent=35 // pred_fallthru
        _
    $region36: #{positional_encoding_forward.1} parent=5 // pred_fallthru
      _
  $region6: #{positional_encoding_forward.1} parent=0 // loop_footer
    %s14 = sadd.s32 1, %s10
  $region7: #{positional_encoding_forward.1} parent=0 // loop_footer_branch
    %9 = sbr.rel target = $region3
  $region8: #{positional_encoding_forward.1} parent=0 // loop_exit
    _

</llo_original>
